<compile_context>
chip_gen: v7x
topology: tpu7x:2x2x1
jax: 0.10.0
libtpu: 0.0.40
codegen_flags: <defaults>
</compile_context>

<pallas_src>
import math

import jax
import jax.numpy as jnp
from jax.experimental import pallas as pl
from jax.experimental.pallas import tpu as pltpu


def _round_up(x: int, m: int) -> int:
    return (x + m - 1) // m * m


def _pos_emb_kernel(t_ref, freqs_ref, phase_ref, out_ref):
    # t_ref: (tile_b, 1) f32; freqs_ref/phase_ref: (1, dim) f32; out: (tile_b, dim).
    # Broadcasted outer product + per-lane phase, one sin per output vreg.
    out_ref[...] = jnp.sin(t_ref[...] * freqs_ref[...] + phase_ref[...])


def sinusoidal_pos_emb(timestep: jax.Array, dim: int, theta: float = 10000.0,
                       *, target_block_bytes: int = 2 << 20,
                       max_tile_b: int = 4096) -> jax.Array:
    """Pallas implementation of SinusoidalPosEmb.forward.

    Args:
        timestep: (B,) array of timesteps (any numeric dtype; cast to f32).
        dim: embedding dimension (even, >= 4).
        theta: transformer constant.
        target_block_bytes: target output-block size for batch tiling.
        max_tile_b: cap on rows per grid step (VMEM guard).

    Returns:
        (B, dim) float32 embeddings, [:, :dim//2] = sin, [:, dim//2:] = cos.
    """
    assert dim % 2 == 0, "dim must be even"
    assert dim >= 4, "dim must be >= 4 (half_dim - 1 would be zero otherwise)"

    b = timestep.shape[0]
    half = dim // 2

    # Constant rows, computed once outside the kernel (hoisted per review).
    # freqs is bit-identical on both lane halves to the reference
    # exp(arange(half) * -(log(theta)/(half-1))); phase selects sin vs cos.
    neg_scale = -(math.log(theta) / (half - 1))
    lane = jnp.arange(dim, dtype=jnp.int32)
    folded = jnp.where(lane < half, lane, lane - half).astype(jnp.float32)
    freqs = jnp.exp(folded * neg_scale).reshape(1, dim)
    phase = jnp.where(lane < half, 0.0, math.pi / 2.0).astype(jnp.float32).reshape(1, dim)

    # Batch tiling: ~target_block_bytes per output block, tile a multiple of 8
    # whenever we grid, at least 2 grid steps for B >= 16 (v7x dual-TC), and no
    # explicit padding — the boundary block is masked by Pallas.
    row_bytes = dim * 4
    tile_target = max(8, min(max_tile_b,
                             _round_up(max(1, target_block_bytes // row_bytes), 8)))
    num_tiles = pl.cdiv(b, tile_target)
    if num_tiles == 1 and b >= 16:
        num_tiles = 2  # use both TensorCores on v7x; harmless on v5e/v6e
    tile = min(b, _round_up(pl.cdiv(b, num_tiles), 8))
    grid = pl.cdiv(b, tile)

    t2d = timestep.astype(jnp.float32).reshape(b, 1)

    return pl.pallas_call(
        _pos_emb_kernel,
        out_shape=jax.ShapeDtypeStruct((b, dim), jnp.float32),
        grid=(grid,),
        in_specs=[
            pl.BlockSpec((tile, 1), lambda i: (i, 0)),
            pl.BlockSpec((1, dim), lambda i: (0, 0)),   # VMEM-resident constants
            pl.BlockSpec((1, dim), lambda i: (0, 0)),
        ],
        out_specs=pl.BlockSpec((tile, dim), lambda i: (i, 0)),
        compiler_params=pltpu.CompilerParams(
            dimension_semantics=("parallel",)),
    )(t2d, freqs, phase)


def _reference(timestep, dim, theta=10000.0):
    """Pure-JAX reference mirroring the PyTorch forward."""
    half = dim // 2
    emb = math.log(theta) / (half - 1)
    emb = jnp.exp(jnp.arange(half, dtype=jnp.float32) * -emb)
    emb = timestep.astype(jnp.float32)[:, None] * emb[None, :]
    return jnp.concatenate([jnp.sin(emb), jnp.cos(emb)], axis=-1)


if __name__ == "__main__":
    key = jax.random.PRNGKey(0)

    # Small shape matching the module's usage: timestep (B,), dim embedding.
    B, DIM = 2, 32
    timestep = jax.random.randint(key, (B,), 0, 1000).astype(jnp.float32)

    out = jax.block_until_ready(sinusoidal_pos_emb(timestep, DIM))
    ref = _reference(timestep, DIM)
    assert out.shape == (B, DIM)
    # cos(x) == sin(x + pi/2) up to the f32 rounding of (x + pi/2); for x ~ 1e3
    # that is ~3e-5 — same order as the f32 error already present in x = t*freq.
    assert jnp.allclose(out, ref, atol=2e-4, rtol=0.0), "mismatch vs reference (small)"

    # Second check: exercises the multi-block grid + masked boundary block.
    B2, DIM2 = 1040, 256
    timestep2 = jax.random.randint(jax.random.PRNGKey(1), (B2,), 0, 1000).astype(jnp.float32)
    out2 = jax.block_until_ready(sinusoidal_pos_emb(timestep2, DIM2))
    ref2 = _reference(timestep2, DIM2)
    assert out2.shape == (B2, DIM2)
    assert jnp.allclose(out2, ref2, atol=2e-4, rtol=0.0), "mismatch vs reference (gridded)"

    print("KERNEL_OK")
</pallas_src>

<mosaic_0001>
module attributes {stable_mosaic.version = 11 : i64} {
  func.func @_pos_emb_kernel(%arg0: i32, %arg1: memref<2x1xf32, #tpu.memory_space<vmem>>, %arg2: memref<1x32xf32, #tpu.memory_space<vmem>>, %arg3: memref<1x32xf32, #tpu.memory_space<vmem>>, %arg4: memref<2x32xf32, #tpu.memory_space<vmem>>) attributes {dimension_semantics = [#tpu.dimension_semantics<parallel>], iteration_bounds = array<i64: 1>, scalar_prefetch = 0 : i64, scratch_operands = 0 : i64, tpu.core_type = #tpu.core_type<tc>, window_params = [{transform_indices = @transform_0, window_bounds = array<i64: 2, 1>}, {pipeline_mode = #tpu.pipeline_mode<synchronous>, transform_indices = @transform_1, window_bounds = array<i64: 1, 32>}, {pipeline_mode = #tpu.pipeline_mode<synchronous>, transform_indices = @transform_2, window_bounds = array<i64: 1, 32>}, {transform_indices = @transform_3, window_bounds = array<i64: 2, 32>}]} {
    %c0 = arith.constant 0 : index
    %c0_0 = arith.constant 0 : index
    %0 = vector.load %arg1[%c0, %c0_0] : memref<2x1xf32, #tpu.memory_space<vmem>>, vector<2x1xf32>
    %c0_1 = arith.constant 0 : index
    %c0_2 = arith.constant 0 : index
    %1 = vector.load %arg2[%c0_1, %c0_2] : memref<1x32xf32, #tpu.memory_space<vmem>>, vector<1x32xf32>
    %2 = vector.broadcast %0 : vector<2x1xf32> to vector<2x32xf32>
    %3 = vector.broadcast %1 : vector<1x32xf32> to vector<2x32xf32>
    %4 = arith.mulf %2, %3 : vector<2x32xf32>
    %c0_3 = arith.constant 0 : index
    %c0_4 = arith.constant 0 : index
    %5 = vector.load %arg3[%c0_3, %c0_4] : memref<1x32xf32, #tpu.memory_space<vmem>>, vector<1x32xf32>
    %6 = vector.broadcast %5 : vector<1x32xf32> to vector<2x32xf32>
    %7 = arith.addf %4, %6 : vector<2x32xf32>
    %8 = math.sin %7 : vector<2x32xf32>
    %c0_5 = arith.constant 0 : index
    %c0_6 = arith.constant 0 : index
    %9 = vector.load %arg4[%c0_5, %c0_6] : memref<2x32xf32, #tpu.memory_space<vmem>>, vector<2x32xf32>
    tpu.vector_store %arg4[%c0_5, %c0_6], %8 {strides = array<i32>} : memref<2x32xf32, #tpu.memory_space<vmem>>, vector<2x32xf32>,
    return
  }
  func.func @transform_0(%arg0: i32) -> (i32, i32) {
    %c0_i32 = arith.constant 0 : i32
    %c0_i32_0 = arith.constant 0 : i32
    return %arg0, %c0_i32 : i32, i32
  }
  func.func @transform_1(%arg0: i32) -> (i32, i32) {
    %c0_i32 = arith.constant 0 : i32
    %c0_i32_0 = arith.constant 0 : i32
    %c0_i32_1 = arith.constant 0 : i32
    return %c0_i32, %c0_i32_0 : i32, i32
  }
  func.func @transform_2(%arg0: i32) -> (i32, i32) {
    %c0_i32 = arith.constant 0 : i32
    %c0_i32_0 = arith.constant 0 : i32
    %c0_i32_1 = arith.constant 0 : i32
    return %c0_i32, %c0_i32_0 : i32, i32
  }
  func.func @transform_3(%arg0: i32) -> (i32, i32) {
    %c0_i32 = arith.constant 0 : i32
    %c0_i32_0 = arith.constant 0 : i32
    return %arg0, %c0_i32 : i32, i32
  }
}

</mosaic_0001>

<llo_original>
// kernel: tpu_custom_call.1
$region0: #{tpu_custom_call.1}
  #allocation0 [shape = 'u32[]', space=smem, size = 0x4, offset = 0x4, fixed_abs, tag = 'smem constant byte address 0x4 - core index']
  #allocation1 [shape = 'u32[144,128]{1,0:T(1,128)}', space=vmem, size = 0x12000, scoped, tag = 'internal scratch']
  %s0 = inlined_call_operand.vmem [shape: f32[2,1], index: 0, kind: input, shape index: {}]
  %s1 = inlined_call_operand.vmem [shape: f32[1,32], index: 1, kind: input, shape index: {}]
  %s2 = inlined_call_operand.vmem [shape: f32[1,32], index: 2, kind: input, shape index: {}]
  %s3 = inlined_call_operand.hbm [shape: f32[2,32], index: 3, kind: output, shape index: {}]
  %s4 = sld [smem:[#allocation0]]
  $region22: #{tpu_custom_call.1} parent=0
    _
  %s6 = ssub.s32 1, %s4
  %s7 = scalar_select 0, %s6, %s4
  $region1: #{tpu_custom_call.1} parent=0
    #allocation2 [shape = 'u8[1024]{0}', space=vmem, size = 0x400, scoped, tag = 'output window, operand 0, single buffered']
    #allocation3 [shape = 's32[1]{0}', space=sflag, size = 0x4, scoped, tag = 'scoped memory for tpu_custom_call.1']
    %8 = vsyncpa [#allocation3], 0
    // Predicated region
    $region2: #{tpu_custom_call.1} parent=1 // pred_check
      _
    $region3: #{tpu_custom_call.1} parent=1 // pred_check_branch
      %10 = sbr.rel (0) target = $region5
    $region4: #{tpu_custom_call.1} parent=1 // pred_region
      _
    $region5: #{tpu_custom_call.1} parent=1 // pred_fallthru
      _
    // Predicated region
    $region6: #{tpu_custom_call.1} parent=1 // pred_check
      _
    $region7: #{tpu_custom_call.1} parent=1 // pred_check_branch
      %12 = sbr.rel (0) target = $region9
    $region8: #{tpu_custom_call.1} parent=1 // pred_region
      _
    $region9: #{tpu_custom_call.1} parent=1 // pred_fallthru
      _
    // Predicated region
    $region10: #{tpu_custom_call.1} parent=1 // pred_check
      _
    $region11: #{tpu_custom_call.1} parent=1 // pred_check_branch
      %14 = sbr.rel (0) target = $region13
    $region12: #{tpu_custom_call.1} parent=1 // pred_region
      _
    $region13: #{tpu_custom_call.1} parent=1 // pred_fallthru
      _
    %v15 = vld [vmem:[%s0] sm:$0x3]
    %v16 = vld [vmem:[%s1] sm:$0x1]
    %18 = vset.pattern.permute.xlu0 0
    %19 = vperm.xlu0 %18, %v15
    %v20 = vpop.permute.xlu0 %19
    %v23 = vlaneseq
    %v24 = vshrl.u32 %v23, 7
    %v25 = vsub.s32 0, %v24
    %v26 = vrot.slane %v16, %v25
    %v28 = vmul.f32 %v20, %v26
    %v29 = vld [vmem:[%s2] sm:$0x1]
    %v31 = vlaneseq
    %v32 = vshrl.u32 %v31, 7
    %v33 = vsub.s32 0, %v32
    %v34 = vrot.slane %v29, %v33
    %v36 = vadd.f32 %v28, %v34
    %v37 = vand.u32 2147483647, %v36
    %vm38 = vcmp.le.f32.partialorder %v37, 0.7853982
    %vm39 = vcmp.lt.s32.totalorder %v36, 0
    %v40 = vand.u32 %v36, 2139095040
    %v41 = vshrl.u32 %v40, 23
    %v42 = vsub.s32 %v41, 127
    %v43 = vand.u32 2147483647, %v36
    %v44 = vand.u32 %v43, 8388607
    %v45 = vor.u32 %v44, 8388608
    %v46 = vsub.s32 0, %v45
    %v47 = vadd.s32 %v42, 1
    %vm48 = vcmp.gt.s32.totalorder %v47, 0
    %v49 = vsel %vm48, %v47, 0
    %v50 = vshrl.u32 %v49, 5
    %v51 = vand.u32 %v49, 31
    %v52 = vsub.s32 32, %v51
    %v53 = vshrl.u32 683565275, %v52
    %v54 = vshll.u32 683565275, %v51
    %v55 = vshrl.u32 2475754826, %v52
    %v56 = vor.u32 %v54, %v55
    %v57 = vshll.u32 2475754826, %v51
    %v58 = vshrl.u32 2131351028, %v52
    %v59 = vor.u32 %v57, %v58
    %v60 = vshll.u32 2131351028, %v51
    %v61 = vshrl.u32 2102212464, %v52
    %v62 = vor.u32 %v60, %v61
    %v63 = vshll.u32 2102212464, %v51
    %v64 = vshrl.u32 920167782, %v52
    %v65 = vor.u32 %v63, %v64
    %v66 = vshll.u32 920167782, %v51
    %v67 = vshrl.u32 1326507024, %v52
    %v68 = vor.u32 %v66, %v67
    %vm69 = vcmp.lt.s32.totalorder %v50, 1
    %vm70 = vcmp.lt.s32.totalorder %v50, 2
    %vm71 = vcmp.lt.s32.totalorder %v50, 3
    %vm72 = vcmp.lt.s32.totalorder %v50, 4
    %v73 = vsel %vm69, %v53, %v56
    %v74 = vsel %vm72, %v62, 2102212464
    %v75 = vsel %vm71, %v59, %v74
    %v76 = vsel %vm70, %v73, %v75
    %v77 = vsel %vm69, %v56, %v59
    %v78 = vsel %vm72, %v65, 920167782
    %v79 = vsel %vm71, %v62, %v78
    %v80 = vsel %vm70, %v77, %v79
    %v81 = vsel %vm69, %v59, %v62
    %v82 = vsel %vm72, %v68, 1326507024
    %v83 = vsel %vm71, %v65, %v82
    %v84 = vsel %vm70, %v81, %v83
    %v85 = vshll.u32 %v45, 8
    %v86 = vmul.u32.u64.compose %v85, %v84
    %v87 = vextract.low.u32 %v86
    %v88 = vextract.high.u32 %v86
    %v89 = vmul.u32.u64.compose %v85, %v80
    %v90 = vextract.low.u32 %v89
    %v91 = vextract.high.u32 %v89
    %v92 = vmul.u32 %v85, %v76
    %v93 = vadd.s32 %v88, %v90
    %vm94 = vc.u32 %v88, %v90
    %v95 = vadd.s32 %v91, 1
    %v96 = vsel %vm94, %v95, %v91
    %v97 = vadd.s32 %v92, %v96
    %v98 = vadd.s32 %v97, 536870912
    %v99 = vshrl.u32 %v98, 30
    %v100 = vshll.u32 %v99, 30
    %v101 = vsub.s32 %v97, %v100
    %vm102 = vcmp.lt.s32.totalorder %v101, 0
    %v103 = vsub.s32 0, %v101
    %v104 = vsel %vm102, %v103, %v101
    %v105 = vclz %v104
    %v106 = vsub.s32 %v105, 2
    %vm107 = vcmp.gt.s32.totalorder 0, %v106
    %v108 = vsel %vm107, 0, %v106
    %v109 = vsub.s32 32, %v108
    %v110 = vshll.u32 %v101, %v108
    %v111 = vshrl.u32 %v93, %v109
    %v112 = vor.u32 %v110, %v111
    %v113 = vsub.s32 4294967266, %v108
    %v114 = vadd.s32 %v113, 127
    %v115 = vshll.u32 %v114, 23
    %v116 = vor.u32 4788187, %v115
    %v117 = vand.u32 2147483647, %v116
    %v119 = vcvt.s32.f32 %v112
    %v120 = vmul.f32 %v119, %v117
    %v121 = vxor.u32 %v120, 2147483648
    %v122 = vsel %vm39, %v121, %v120
    %v123 = vsub.s32 4, %v99
    %v124 = vsel %vm39, %v123, %v99
    %v125 = vsel %vm38, %v36, %v122
    %v126 = vsel %vm38, 0, %v124
    %v127 = vcosq.f32.pop %v125
    %v128 = vsinq.f32.pop %v125
    %vm129 = vweird.f32 %v36
    %v130 = vadd.s32 %v126, 3
    %v131 = vand.u32 %v130, 3
    %vm132 = vcmp.lt.s32.totalorder %v131, 2
    %vm133 = vcmp.eq.s32.totalorder %v131, 0
    %v134 = vxor.u32 %v128, 2147483648
    %v135 = vsel %vm133, %v127, %v134
    %vm136 = vcmp.eq.s32.totalorder %v131, 2
    %v137 = vxor.u32 %v127, 2147483648
    %v138 = vsel %vm136, %v137, %v128
    %v139 = vsel %vm132, %v135, %v138
    %v140 = vsel %vm129, nan, %v139
    %vm141 = vcmask 254976
    %142 = vst.msk [vmem:[#allocation2] sm:$0x3] %vm141, %v140
    // Predicated region
    $region14: #{tpu_custom_call.1} parent=1 // pred_check
      _
    $region15: #{tpu_custom_call.1} parent=1 // pred_check_branch
      %144 = sbr.rel (0) target = $region17
    $region16: #{tpu_custom_call.1} parent=1 // pred_region
      %s146 = ssub.s32 32, 32
      %147 = vsyncadd [#allocation3], %s146
      %s149 = sshll.u32 [#allocation2], 4
      %s150 = int_to_ptr.vmem [resolvable:$true] %s149
      %152 = dma.vmem_to_hbm [thread:$0]  %s150, 32, %s3, [#allocation3]
    $region17: #{tpu_custom_call.1} parent=1 // pred_fallthru
      _
    // Predicated region
    $region18: #{tpu_custom_call.1} parent=1 // pred_check
      _
    $region19: #{tpu_custom_call.1} parent=1 // pred_check_branch
      %154 = sbr.rel (0) target = $region21
    $region20: #{tpu_custom_call.1} parent=1 // pred_region
      %155 = dma.done [#allocation3], 32
    $region21: #{tpu_custom_call.1} parent=1 // pred_fallthru
      _
    %156 = vsyncpa [#allocation3], 1

</llo_original>
